<compile_context>
chip_gen: v7x
topology: tpu7x:2x2x1
jax: 0.10.0
libtpu: 0.0.40
codegen_flags: <defaults>
</compile_context>

<pallas_src>
import functools

import jax
import jax.numpy as jnp
from jax.experimental import pallas as pl
from jax.experimental.pallas import tpu as pltpu


ENSEMBLE = 2  # twin Q networks (TD3)


# ----------------------------- activations ----------------------------------
def _apply_activation(x, activation):
    if activation == "swish":
        return x * jax.nn.sigmoid(x)          # sigmoid -> EUP slot (free-ish)
    if activation == "relu":
        return jnp.maximum(x, 0.0)
    if activation == "tanh":
        return jnp.tanh(x)
    if activation == "leaky_relu":
        return jnp.where(x >= 0.0, x, 0.01 * x)   # nn.LeakyReLU default slope
    raise NotImplementedError(f"Unknown activation {activation}")


# ------------------------------- kernel --------------------------------------
def _twin_q_kernel(x_ref, *refs, n_linear, activation):
    """refs = (w, b) * n_linear, o_ref.

    x_ref: (d_in, bt) -- batch lives on the lane axis.
    Layer 0 weight: (2*out0, d_in)  (both ensemble members share the input).
    Layer l>=1 weight: block-diagonal (2*out_l, 2*in_l).
    The hidden stays a single (2*width, bt) tensor; the final layer produces
    (2, bt), which is stored as one lane-dense full block.
    """
    o_ref = refs[-1]
    p_refs = refs[:-1]

    h = x_ref[...]                                   # (d_in, bt)
    for lyr in range(n_linear):
        w = p_refs[2 * lyr][...]                     # (2*out, in) fused weight
        b = p_refs[2 * lyr + 1][...]                 # (2*out, 1)
        h = jnp.dot(w, h, preferred_element_type=jnp.float32) + b
        if lyr < n_linear - 1:                       # no activation after last
            h = _apply_activation(h, activation)
    o_ref[...] = h.astype(o_ref.dtype)               # (2, bt) full-block store


# ------------------------------ wrapper --------------------------------------
def _round_up(x, m):
    return ((x + m - 1) // m) * m


def _choose_tiling(batch, batch_tile):
    """Pad batch to a multiple of 128; pick a 128-multiple tile that divides
    the padded batch, honoring batch_tile and giving >= 2 grid steps whenever
    possible (so the parallel grid axis can shard across v7x TensorCores)."""
    b_pad = _round_up(max(batch, 1), 128)
    blocks = b_pad // 128
    batch_tile = max(128, _round_up(batch_tile, 128))
    target = max(-(-b_pad // batch_tile), 2 if blocks >= 2 else 1)
    n_tiles = blocks
    for d in range(target, blocks + 1):              # smallest divisor >= target
        if blocks % d == 0:
            n_tiles = d
            break
    return b_pad, b_pad // n_tiles


def _pack_params(params):
    """Fuse the twin-Q ensemble into one weight/bias per layer.

    Layer 0:    W_f = [W0; W1]                 -> (2*out, in)
    Layer l>=1: W_f = blockdiag(W0, W1)        -> (2*out, 2*in)
    Bias:       b_f = [b0; b1][:, None]        -> (2*out, 1)
    """
    packed = []
    for lyr, (w, b) in enumerate(params):            # w: (2,out,in), b: (2,out)
        out_d, in_d = w.shape[1], w.shape[2]
        if lyr == 0:
            wf = jnp.concatenate([w[0], w[1]], axis=0)
        else:
            wf = jnp.zeros((ENSEMBLE * out_d, ENSEMBLE * in_d), w.dtype)
            wf = wf.at[:out_d, :in_d].set(w[0])
            wf = wf.at[out_d:, in_d:].set(w[1])
        bf = jnp.concatenate([b[0], b[1]], axis=0)[:, None]
        packed.append((wf, bf))
    return packed


def action_value_forward(state, action, params, activation="swish",
                         batch_tile=1024):
    """Twin-Q forward.

    params: list of (W, b) per layer with W of shape (2, n_out, n_in) and b of
    shape (2, n_out).  Returns (2, batch, 1), matching the PyTorch module.
    """
    B, d_state = state.shape
    _, d_action = action.shape
    d_in = d_state + d_action
    n_linear = len(params)
    out_dtype = state.dtype

    b_pad, bt = _choose_tiling(B, batch_tile)

    # Lane-dense input slab: (d_in, b_pad), batch on the lane axis.  Padded
    # rows compute garbage Q-values that are sliced off below.
    x = jnp.concatenate([state, action], axis=1)     # (B, d_in)
    if b_pad != B:
        x = jnp.pad(x, ((0, b_pad - B), (0, 0)))
    x_t = x.T                                        # (d_in, b_pad)

    packed = _pack_params(params)
    flat_args = [x_t]
    in_specs = [pl.BlockSpec((d_in, bt), lambda i: (0, i))]
    # Fused parameters: tiny untiled full blocks, constant block index ->
    # fetched once by the pipeline.
    for w, b in packed:
        flat_args += [w, b]
        in_specs += [pl.BlockSpec(w.shape, lambda i: (0, 0)),
                     pl.BlockSpec(b.shape, lambda i: (0, 0))]

    kernel = functools.partial(_twin_q_kernel, n_linear=n_linear,
                               activation=activation)

    out = pl.pallas_call(
        kernel,
        out_shape=jax.ShapeDtypeStruct((ENSEMBLE, b_pad), out_dtype),
        grid_spec=pltpu.PrefetchScalarGridSpec(
            num_scalar_prefetch=0,
            grid=(b_pad // bt,),
            in_specs=in_specs,
            out_specs=pl.BlockSpec((ENSEMBLE, bt), lambda i: (0, i)),
        ),
        compiler_params=pltpu.CompilerParams(
            dimension_semantics=("parallel",)),
    )(*flat_args)

    # (2, b_pad) -> (2, B, 1): drop pad columns, restore the trailing unit dim.
    return out[:, :B, None]


# --------------------------- parameter setup ---------------------------------
def init_action_value_params(key, d_state, d_action, n_layers, n_units):
    """Xavier-uniform weights like ParallelLinear; weights stored (2, out, in).
    Biases are given small random values so the bias-add path is exercised
    (the PyTorch module zero-inits them; init is not part of forward semantics).
    """
    d_in = d_state + d_action
    dims = [d_in, 1] if n_layers == 0 else [d_in] + [n_units] * n_layers + [1]
    params = []
    for fan_in, fan_out in zip(dims[:-1], dims[1:]):
        key, kw, kb = jax.random.split(key, 3)
        bound = (6.0 / (fan_in + fan_out)) ** 0.5
        w = jax.random.uniform(kw, (ENSEMBLE, fan_out, fan_in), jnp.float32,
                               -bound, bound)
        b = jax.random.uniform(kb, (ENSEMBLE, fan_out), jnp.float32,
                               -0.05, 0.05)
        params.append((w, b))
    return params


# --------------------------- pure-JAX reference -------------------------------
def action_value_ref(state, action, params, activation="swish"):
    """Mirrors the PyTorch forward: cat -> repeat over ensemble -> baddbmm MLP."""
    x = jnp.concatenate([state, action], axis=-1)             # (B, d_in)
    h = jnp.broadcast_to(x[None], (ENSEMBLE,) + x.shape)      # (2, B, d_in)
    n_linear = len(params)
    for lyr, (w, b) in enumerate(params):
        # th.baddbmm(b, h, W_torch) with W_torch = transpose(w, (0, 2, 1)).
        h = jnp.einsum("ebi,eoi->ebo", h, w) + b[:, None, :]
        if lyr < n_linear - 1:
            h = _apply_activation(h, activation)
    return h                                                  # (2, B, 1)


# --------------------------------- main ---------------------------------------
if __name__ == "__main__":
    d_state, d_action = 24, 8       # concat dim = 32
    activation = "swish"

    key = jax.random.PRNGKey(0)
    for n_layers, n_units in ((2, 32), (0, 32)):   # deep MLP + single-layer edge case
        key, kp = jax.random.split(key)
        params = init_action_value_params(kp, d_state, d_action,
                                          n_layers, n_units)
        for batch in (256, 200):    # 128-aligned batch + non-multiple batch
            key, k1, k2 = jax.random.split(key, 3)
            state = jax.random.normal(k1, (batch, d_state), jnp.float32)
            action = jax.random.normal(k2, (batch, d_action), jnp.float32)

            out = jax.block_until_ready(
                action_value_forward(state, action, params, activation))
            ref = action_value_ref(state, action, params, activation)

            assert out.shape == (ENSEMBLE, batch, 1), out.shape
            max_err = float(jnp.max(jnp.abs(out - ref)))
            assert jnp.allclose(out, ref, atol=1e-4, rtol=1e-4), (
                f"mismatch vs reference at n_layers={n_layers}, "
                f"batch={batch}: max_err={max_err}")

    print("KERNEL_OK")
</pallas_src>

<mosaic_0001>
module attributes {stable_mosaic.version = 11 : i64} {
  func.func @_twin_q_kernel(%arg0: i32, %arg1: memref<32x128xf32, #tpu.memory_space<vmem>>, %arg2: memref<64x32xf32, #tpu.memory_space<vmem>>, %arg3: memref<64x1xf32, #tpu.memory_space<vmem>>, %arg4: memref<64x64xf32, #tpu.memory_space<vmem>>, %arg5: memref<64x1xf32, #tpu.memory_space<vmem>>, %arg6: memref<2x64xf32, #tpu.memory_space<vmem>>, %arg7: memref<2x1xf32, #tpu.memory_space<vmem>>, %arg8: memref<2x128xf32, #tpu.memory_space<vmem>>) attributes {dimension_semantics = [#tpu.dimension_semantics<parallel>], iteration_bounds = array<i64: 2>, scalar_prefetch = 0 : i64, scratch_operands = 0 : i64, tpu.core_type = #tpu.core_type<tc>, window_params = [{transform_indices = @transform_0, window_bounds = array<i64: 32, 128>}, {pipeline_mode = #tpu.pipeline_mode<synchronous>, transform_indices = @transform_1, window_bounds = array<i64: 64, 32>}, {pipeline_mode = #tpu.pipeline_mode<synchronous>, transform_indices = @transform_2, window_bounds = array<i64: 64, 1>}, {pipeline_mode = #tpu.pipeline_mode<synchronous>, transform_indices = @transform_3, window_bounds = array<i64: 64, 64>}, {pipeline_mode = #tpu.pipeline_mode<synchronous>, transform_indices = @transform_4, window_bounds = array<i64: 64, 1>}, {pipeline_mode = #tpu.pipeline_mode<synchronous>, transform_indices = @transform_5, window_bounds = array<i64: 2, 64>}, {pipeline_mode = #tpu.pipeline_mode<synchronous>, transform_indices = @transform_6, window_bounds = array<i64: 2, 1>}, {transform_indices = @transform_7, window_bounds = array<i64: 2, 128>}]} {
    %c0 = arith.constant 0 : index
    %c0_0 = arith.constant 0 : index
    %0 = vector.load %arg1[%c0, %c0_0] : memref<32x128xf32, #tpu.memory_space<vmem>>, vector<32x128xf32>
    %c0_1 = arith.constant 0 : index
    %c0_2 = arith.constant 0 : index
    %1 = vector.load %arg2[%c0_1, %c0_2] : memref<64x32xf32, #tpu.memory_space<vmem>>, vector<64x32xf32>
    %c0_3 = arith.constant 0 : index
    %c0_4 = arith.constant 0 : index
    %2 = vector.load %arg3[%c0_3, %c0_4] : memref<64x1xf32, #tpu.memory_space<vmem>>, vector<64x1xf32>
    %cst = arith.constant dense<0.000000e+00> : vector<64x128xf32>
    %3 = tpu.matmul %1, %0, %cst {dimension_numbers = #tpu.dot_dimension_numbers<[1], [0], [0], [1], [0, 0, 1, 1], [], []>} : vector<64x32xf32>, vector<32x128xf32>, vector<64x128xf32> -> vector<64x128xf32>
    %4 = vector.broadcast %2 : vector<64x1xf32> to vector<64x128xf32>
    %5 = arith.addf %3, %4 : vector<64x128xf32>
    %6 = arith.negf %5 : vector<64x128xf32>
    %7 = math.exp %6 : vector<64x128xf32>
    %cst_5 = arith.constant 1.000000e+00 : f32
    %8 = vector.broadcast %cst_5 : f32 to vector<64x128xf32>
    %9 = arith.addf %8, %7 : vector<64x128xf32>
    %10 = arith.divf %8, %9 : vector<64x128xf32>
    %11 = arith.mulf %5, %10 : vector<64x128xf32>
    %c0_6 = arith.constant 0 : index
    %c0_7 = arith.constant 0 : index
    %12 = vector.load %arg4[%c0_6, %c0_7] : memref<64x64xf32, #tpu.memory_space<vmem>>, vector<64x64xf32>
    %c0_8 = arith.constant 0 : index
    %c0_9 = arith.constant 0 : index
    %13 = vector.load %arg5[%c0_8, %c0_9] : memref<64x1xf32, #tpu.memory_space<vmem>>, vector<64x1xf32>
    %cst_10 = arith.constant dense<0.000000e+00> : vector<64x128xf32>
    %14 = tpu.matmul %12, %11, %cst_10 {dimension_numbers = #tpu.dot_dimension_numbers<[1], [0], [0], [1], [0, 0, 1, 1], [], []>} : vector<64x64xf32>, vector<64x128xf32>, vector<64x128xf32> -> vector<64x128xf32>
    %15 = vector.broadcast %13 : vector<64x1xf32> to vector<64x128xf32>
    %16 = arith.addf %14, %15 : vector<64x128xf32>
    %17 = arith.negf %16 : vector<64x128xf32>
    %18 = math.exp %17 : vector<64x128xf32>
    %cst_11 = arith.constant 1.000000e+00 : f32
    %19 = vector.broadcast %cst_11 : f32 to vector<64x128xf32>
    %20 = arith.addf %19, %18 : vector<64x128xf32>
    %21 = arith.divf %19, %20 : vector<64x128xf32>
    %22 = arith.mulf %16, %21 : vector<64x128xf32>
    %c0_12 = arith.constant 0 : index
    %c0_13 = arith.constant 0 : index
    %23 = vector.load %arg6[%c0_12, %c0_13] : memref<2x64xf32, #tpu.memory_space<vmem>>, vector<2x64xf32>
    %c0_14 = arith.constant 0 : index
    %c0_15 = arith.constant 0 : index
    %24 = vector.load %arg7[%c0_14, %c0_15] : memref<2x1xf32, #tpu.memory_space<vmem>>, vector<2x1xf32>
    %cst_16 = arith.constant dense<0.000000e+00> : vector<2x128xf32>
    %25 = tpu.matmul %23, %22, %cst_16 {dimension_numbers = #tpu.dot_dimension_numbers<[1], [0], [0], [1], [0, 0, 1, 1], [], []>} : vector<2x64xf32>, vector<64x128xf32>, vector<2x128xf32> -> vector<2x128xf32>
    %26 = vector.broadcast %24 : vector<2x1xf32> to vector<2x128xf32>
    %27 = arith.addf %25, %26 : vector<2x128xf32>
    %c0_17 = arith.constant 0 : index
    %c0_18 = arith.constant 0 : index
    %28 = vector.load %arg8[%c0_17, %c0_18] : memref<2x128xf32, #tpu.memory_space<vmem>>, vector<2x128xf32>
    tpu.vector_store %arg8[%c0_17, %c0_18], %27 {strides = array<i32>} : memref<2x128xf32, #tpu.memory_space<vmem>>, vector<2x128xf32>,
    return
  }
  func.func @transform_0(%arg0: i32) -> (i32, i32) {
    %c0_i32 = arith.constant 0 : i32
    %c0_i32_0 = arith.constant 0 : i32
    return %c0_i32, %arg0 : i32, i32
  }
  func.func @transform_1(%arg0: i32) -> (i32, i32) {
    %c0_i32 = arith.constant 0 : i32
    %c0_i32_0 = arith.constant 0 : i32
    %c0_i32_1 = arith.constant 0 : i32
    return %c0_i32, %c0_i32_0 : i32, i32
  }
  func.func @transform_2(%arg0: i32) -> (i32, i32) {
    %c0_i32 = arith.constant 0 : i32
    %c0_i32_0 = arith.constant 0 : i32
    %c0_i32_1 = arith.constant 0 : i32
    return %c0_i32, %c0_i32_0 : i32, i32
  }
  func.func @transform_3(%arg0: i32) -> (i32, i32) {
    %c0_i32 = arith.constant 0 : i32
    %c0_i32_0 = arith.constant 0 : i32
    %c0_i32_1 = arith.constant 0 : i32
    return %c0_i32, %c0_i32_0 : i32, i32
  }
  func.func @transform_4(%arg0: i32) -> (i32, i32) {
    %c0_i32 = arith.constant 0 : i32
    %c0_i32_0 = arith.constant 0 : i32
    %c0_i32_1 = arith.constant 0 : i32
    return %c0_i32, %c0_i32_0 : i32, i32
  }
  func.func @transform_5(%arg0: i32) -> (i32, i32) {
    %c0_i32 = arith.constant 0 : i32
    %c0_i32_0 = arith.constant 0 : i32
    %c0_i32_1 = arith.constant 0 : i32
    return %c0_i32, %c0_i32_0 : i32, i32
  }
  func.func @transform_6(%arg0: i32) -> (i32, i32) {
    %c0_i32 = arith.constant 0 : i32
    %c0_i32_0 = arith.constant 0 : i32
    %c0_i32_1 = arith.constant 0 : i32
    return %c0_i32, %c0_i32_0 : i32, i32
  }
  func.func @transform_7(%arg0: i32) -> (i32, i32) {
    %c0_i32 = arith.constant 0 : i32
    %c0_i32_0 = arith.constant 0 : i32
    return %c0_i32, %arg0 : i32, i32
  }
}

</mosaic_0001>

<llo_original>
// kernel: tpu_custom_call.1
$region0: #{tpu_custom_call.1}
  #allocation0 [shape = 'u32[]', space=smem, size = 0x4, offset = 0x4, fixed_abs, tag = 'smem constant byte address 0x4 - core index']
  #allocation1 [shape = 'u32[144,128]{1,0:T(1,128)}', space=vmem, size = 0x12000, scoped, tag = 'internal scratch']
  %s0 = inlined_call_operand.vmem [shape: f32[32,256], index: 0, kind: input, shape index: {}]
  %s1 = inlined_call_operand.vmem [shape: f32[64,32], index: 1, kind: input, shape index: {}]
  %s2 = inlined_call_operand.vmem [shape: f32[64,1], index: 2, kind: input, shape index: {}]
  %s3 = inlined_call_operand.vmem [shape: f32[64,64], index: 3, kind: input, shape index: {}]
  %s4 = inlined_call_operand.vmem [shape: f32[64,1], index: 4, kind: input, shape index: {}]
  %s5 = inlined_call_operand.vmem [shape: f32[2,64], index: 5, kind: input, shape index: {}]
  %s6 = inlined_call_operand.vmem [shape: f32[2,1], index: 6, kind: input, shape index: {}]
  %s7 = inlined_call_operand.hbm [shape: f32[2,256], index: 7, kind: output, shape index: {}]
  %s8 = sld [smem:[#allocation0]]
  $region99: #{tpu_custom_call.1} parent=0
    _
  %s10 = ssub.s32 1, %s8
  %s11 = scalar_select 0, %s10, %s8
  $region1: #{tpu_custom_call.1} parent=0
    #allocation2 [shape = 'u8[32768]{0}', space=vmem, size = 0x8000, scoped, tag = 'input window, operand 0']
    #allocation3 [shape = 'u8[2048]{0}', space=vmem, size = 0x800, scoped, tag = 'output window, operand 0']
    #allocation4 [shape = 's32[2]{0}', space=sflag, size = 0x8, scoped, tag = 'scoped memory for tpu_custom_call.1']
    %12 = vsyncpa [#allocation4], 0
    %s13 = scalar_lea.sflag [#allocation4], 1
    %14 = vsyncpa %s13, 0
    loop: start=0, step=1, limit=4
    $region2: #{tpu_custom_call.1} parent=1 // loop_pre_header
      _
    $region3: #{tpu_custom_call.1} parent=1 // loop_header
      %s16 = sphi 0, %s20
      %p17 = scmp.ge.s32.totalorder %s16, 4
      %s26 = sphi 0, %s28
      %s29 = sphi 0, %s26
      %s30 = sphi 0, %s29
      %s46 = sphi 0, %s30
      %s50 = sphi 0, %s50
      %s52 = sphi 0, %s50
      %s53 = sphi 0, %s52
      %s67 = sphi 0, %s53
      %s71 = sphi 0, %s71
      %s73 = sphi 0, %s71
      %s74 = sphi 0, %s73
      %s88 = sphi 0, %s74
      %s92 = sphi 0, %s92
      %s94 = sphi 0, %s92
      %s95 = sphi 0, %s94
      %s109 = sphi 0, %s95
      %s113 = sphi 0, %s113
      %s115 = sphi 0, %s113
      %s116 = sphi 0, %s115
      %s130 = sphi 0, %s116
      %s134 = sphi 0, %s134
      %s136 = sphi 0, %s134
      %s137 = sphi 0, %s136
      %s151 = sphi 0, %s137
      %s155 = sphi 0, %s155
      %s157 = sphi 0, %s155
      %s158 = sphi 0, %s157
      %s172 = sphi 0, %s158
      %s178 = sphi 0, %s180
      %s181 = sphi 0, %s178
      %s182 = sphi 0, %s181
      %s198 = sphi 0, %s182
    $region4: #{tpu_custom_call.1} parent=1 // loop_header_branch
      %19 = sbr.rel (%p17) target = $region8
    $region5: #{tpu_custom_call.1} parent=1 // loop_body
      %s21 = ssub.s32 %s16, 1
      %s22 = ssub.s32 %s16, 2
      %s23 = sadd.s32 %s16, 1
      %s24 = ssub.s32 %s16, %s23
      %p25 = scmp.eq.s32.totalorder %s24, 0
      %s27 = sadd.s32 %s26, 1
      %s28 = scalar_select %p25, %s26, %s27
      %p31 = pneg %p25
      %p32 = scmp.eq.s32.totalorder %s16, 1
      %p33 = por %p31, %p32
      %p34 = scmp.ne.s32.totalorder %s26, %s29
      %p35 = scmp.eq.s32.totalorder %s16, 0
      %p36 = por %p34, %p35
      %p37 = scmp.ne.s32.totalorder %s26, %s29
      %p38 = scmp.eq.s32.totalorder %s21, 1
      %p39 = por %p37, %p38
      %p40 = scmp.ne.s32.totalorder %s29, %s30
      %p41 = scmp.eq.s32.totalorder %s21, 0
      %p42 = por %p40, %p41
      %p43 = scmp.ne.s32.totalorder %s29, %s30
      %p44 = scmp.eq.s32.totalorder %s22, 1
      %p45 = por %p43, %p44
      %p47 = scmp.ne.s32.totalorder %s30, %s46
      %p48 = scmp.eq.s32.totalorder %s22, 0
      %p49 = por %p47, %p48
      %s51 = sadd.s32 %s50, 1
      %p54 = scmp.eq.s32.totalorder %s16, 1
      %p55 = scmp.ne.s32.totalorder %s50, %s52
      %p56 = scmp.eq.s32.totalorder %s16, 0
      %p57 = por %p55, %p56
      %p58 = scmp.ne.s32.totalorder %s50, %s52
      %p59 = scmp.eq.s32.totalorder %s21, 1
      %p60 = por %p58, %p59
      %p61 = scmp.ne.s32.totalorder %s52, %s53
      %p62 = scmp.eq.s32.totalorder %s21, 0
      %p63 = por %p61, %p62
      %p64 = scmp.ne.s32.totalorder %s52, %s53
      %p65 = scmp.eq.s32.totalorder %s22, 1
      %p66 = por %p64, %p65
      %p68 = scmp.ne.s32.totalorder %s53, %s67
      %p69 = scmp.eq.s32.totalorder %s22, 0
      %p70 = por %p68, %p69
      %s72 = sadd.s32 %s71, 1
      %p75 = scmp.eq.s32.totalorder %s16, 1
      %p76 = scmp.ne.s32.totalorder %s71, %s73
      %p77 = scmp.eq.s32.totalorder %s16, 0
      %p78 = por %p76, %p77
      %p79 = scmp.ne.s32.totalorder %s71, %s73
      %p80 = scmp.eq.s32.totalorder %s21, 1
      %p81 = por %p79, %p80
      %p82 = scmp.ne.s32.totalorder %s73, %s74
      %p83 = scmp.eq.s32.totalorder %s21, 0
      %p84 = por %p82, %p83
      %p85 = scmp.ne.s32.totalorder %s73, %s74
      %p86 = scmp.eq.s32.totalorder %s22, 1
      %p87 = por %p85, %p86
      %p89 = scmp.ne.s32.totalorder %s74, %s88
      %p90 = scmp.eq.s32.totalorder %s22, 0
      %p91 = por %p89, %p90
      %s93 = sadd.s32 %s92, 1
      %p96 = scmp.eq.s32.totalorder %s16, 1
      %p97 = scmp.ne.s32.totalorder %s92, %s94
      %p98 = scmp.eq.s32.totalorder %s16, 0
      %p99 = por %p97, %p98
      %p100 = scmp.ne.s32.totalorder %s92, %s94
      %p101 = scmp.eq.s32.totalorder %s21, 1
      %p102 = por %p100, %p101
      %p103 = scmp.ne.s32.totalorder %s94, %s95
      %p104 = scmp.eq.s32.totalorder %s21, 0
      %p105 = por %p103, %p104
      %p106 = scmp.ne.s32.totalorder %s94, %s95
      %p107 = scmp.eq.s32.totalorder %s22, 1
      %p108 = por %p106, %p107
      %p110 = scmp.ne.s32.totalorder %s95, %s109
      %p111 = scmp.eq.s32.totalorder %s22, 0
      %p112 = por %p110, %p111
      %s114 = sadd.s32 %s113, 1
      %p117 = scmp.eq.s32.totalorder %s16, 1
      %p118 = scmp.ne.s32.totalorder %s113, %s115
      %p119 = scmp.eq.s32.totalorder %s16, 0
      %p120 = por %p118, %p119
      %p121 = scmp.ne.s32.totalorder %s113, %s115
      %p122 = scmp.eq.s32.totalorder %s21, 1
      %p123 = por %p121, %p122
      %p124 = scmp.ne.s32.totalorder %s115, %s116
      %p125 = scmp.eq.s32.totalorder %s21, 0
      %p126 = por %p124, %p125
      %p127 = scmp.ne.s32.totalorder %s115, %s116
      %p128 = scmp.eq.s32.totalorder %s22, 1
      %p129 = por %p127, %p128
      %p131 = scmp.ne.s32.totalorder %s116, %s130
      %p132 = scmp.eq.s32.totalorder %s22, 0
      %p133 = por %p131, %p132
      %s135 = sadd.s32 %s134, 1
      %p138 = scmp.eq.s32.totalorder %s16, 1
      %p139 = scmp.ne.s32.totalorder %s134, %s136
      %p140 = scmp.eq.s32.totalorder %s16, 0
      %p141 = por %p139, %p140
      %p142 = scmp.ne.s32.totalorder %s134, %s136
      %p143 = scmp.eq.s32.totalorder %s21, 1
      %p144 = por %p142, %p143
      %p145 = scmp.ne.s32.totalorder %s136, %s137
      %p146 = scmp.eq.s32.totalorder %s21, 0
      %p147 = por %p145, %p146
      %p148 = scmp.ne.s32.totalorder %s136, %s137
      %p149 = scmp.eq.s32.totalorder %s22, 1
      %p150 = por %p148, %p149
      %p152 = scmp.ne.s32.totalorder %s137, %s151
      %p153 = scmp.eq.s32.totalorder %s22, 0
      %p154 = por %p152, %p153
      %s156 = sadd.s32 %s155, 1
      %p159 = scmp.eq.s32.totalorder %s16, 1
      %p160 = scmp.ne.s32.totalorder %s155, %s157
      %p161 = scmp.eq.s32.totalorder %s16, 0
      %p162 = por %p160, %p161
      %p163 = scmp.ne.s32.totalorder %s155, %s157
      %p164 = scmp.eq.s32.totalorder %s21, 1
      %p165 = por %p163, %p164
      %p166 = scmp.ne.s32.totalorder %s157, %s158
      %p167 = scmp.eq.s32.totalorder %s21, 0
      %p168 = por %p166, %p167
      %p169 = scmp.ne.s32.totalorder %s157, %s158
      %p170 = scmp.eq.s32.totalorder %s22, 1
      %p171 = por %p169, %p170
      %p173 = scmp.ne.s32.totalorder %s158, %s172
      %p174 = scmp.eq.s32.totalorder %s22, 0
      %p175 = por %p173, %p174
      %s176 = ssub.s32 %s16, %s23
      %p177 = scmp.eq.s32.totalorder %s176, 0
      %s179 = sadd.s32 %s178, 1
      %s180 = scalar_select %p177, %s178, %s179
      %p183 = pneg %p177
      %p184 = scmp.eq.s32.totalorder %s16, 1
      %p185 = por %p183, %p184
      %p186 = scmp.ne.s32.totalorder %s178, %s181
      %p187 = scmp.eq.s32.totalorder %s16, 0
      %p188 = por %p186, %p187
      %p189 = scmp.ne.s32.totalorder %s178, %s181
      %p190 = scmp.eq.s32.totalorder %s21, 1
      %p191 = por %p189, %p190
      %p192 = scmp.ne.s32.totalorder %s181, %s182
      %p193 = scmp.eq.s32.totalorder %s21, 0
      %p194 = por %p192, %p193
      %p195 = scmp.ne.s32.totalorder %s181, %s182
      %p196 = scmp.eq.s32.totalorder %s22, 1
      %p197 = por %p195, %p196
      %p199 = scmp.ne.s32.totalorder %s182, %s198
      %p200 = scmp.eq.s32.totalorder %s22, 0
      %p201 = por %p199, %p200
      %p202 = scmp.le.s32.totalorder 1, %s16
      %p203 = scmp.lt.s32.totalorder %s16, 3
      %p204 = pnand %p202, %p203
      %p205 = pneg %p204
      // Predicated region
      $region9: #{tpu_custom_call.1} parent=5 // pred_check
        _
      $region10: #{tpu_custom_call.1} parent=5 // pred_check_branch
        %207 = sbr.rel (%p204) target = $region12
      $region11: #{tpu_custom_call.1} parent=5 // pred_region
        %s208 = ssub.s32 %s16, 1
        // Predicated region
        $region13: #{tpu_custom_call.1} parent=11 // pred_check
          %p209 = pneg %p63
        $region14: #{tpu_custom_call.1} parent=11 // pred_check_branch
          %211 = sbr.rel (%p209) target = $region16
        $region15: #{tpu_custom_call.1} parent=11 // pred_region
          _
        $region16: #{tpu_custom_call.1} parent=11 // pred_fallthru
          _
        // Predicated region
        $region17: #{tpu_custom_call.1} parent=11 // pred_check
          %p212 = pneg %p84
        $region18: #{tpu_custom_call.1} parent=11 // pred_check_branch
          %214 = sbr.rel (%p212) target = $region20
        $region19: #{tpu_custom_call.1} parent=11 // pred_region
          _
        $region20: #{tpu_custom_call.1} parent=11 // pred_fallthru
          _
        // Predicated region
        $region21: #{tpu_custom_call.1} parent=11 // pred_check
          %p215 = pneg %p105
        $region22: #{tpu_custom_call.1} parent=11 // pred_check_branch
          %217 = sbr.rel (%p215) target = $region24
        $region23: #{tpu_custom_call.1} parent=11 // pred_region
          _
        $region24: #{tpu_custom_call.1} parent=11 // pred_fallthru
          _
        // Predicated region
        $region25: #{tpu_custom_call.1} parent=11 // pred_check
          %p218 = pneg %p126
        $region26: #{tpu_custom_call.1} parent=11 // pred_check_branch
          %220 = sbr.rel (%p218) target = $region28
        $region27: #{tpu_custom_call.1} parent=11 // pred_region
          _
        $region28: #{tpu_custom_call.1} parent=11 // pred_fallthru
          _
        // Predicated region
        $region29: #{tpu_custom_call.1} parent=11 // pred_check
          %p221 = pneg %p147
        $region30: #{tpu_custom_call.1} parent=11 // pred_check_branch
          %223 = sbr.rel (%p221) target = $region32
        $region31: #{tpu_custom_call.1} parent=11 // pred_region
          _
        $region32: #{tpu_custom_call.1} parent=11 // pred_fallthru
          _
        // Predicated region
        $region33: #{tpu_custom_call.1} parent=11 // pred_check
          %p224 = pneg %p168
        $region34: #{tpu_custom_call.1} parent=11 // pred_check_branch
          %226 = sbr.rel (%p224) target = $region36
        $region35: #{tpu_custom_call.1} parent=11 // pred_region
          _
        $region36: #{tpu_custom_call.1} parent=11 // pred_fallthru
          _
      $region12: #{tpu_custom_call.1} parent=5 // pred_fallthru
        _
      %p227 = scmp.lt.s32.totalorder %s16, 2
      // Predicated region
      $region37: #{tpu_custom_call.1} parent=5 // pred_check
        %p228 = pneg %p227
      $region38: #{tpu_custom_call.1} parent=5 // pred_check_branch
        %230 = sbr.rel (%p228) target = $region40
      $region39: #{tpu_custom_call.1} parent=5 // pred_region
        // Predicated region
        $region41: #{tpu_custom_call.1} parent=39 // pred_check
          %p231 = pneg %p36
        $region42: #{tpu_custom_call.1} parent=39 // pred_check_branch
          %233 = sbr.rel (%p231) target = $region44
        $region43: #{tpu_custom_call.1} parent=39 // pred_region
          %s234 = sand.u32 %s26, 1
          %s235 = sand.u32 %s26, 1
          %s236 = smul.addr %s235, 32
          %s237 = scalar_lea.vmem [#allocation2], %s236
          %s238 = smul.addr %s16, 8
          %s239 = scalar_lea.vmem %s0, %s238
          // Predicated region
          $region45: #{tpu_custom_call.1} parent=43 // pred_check
            _
          $region46: #{tpu_custom_call.1} parent=43 // pred_check_branch
            %241 = sbr.rel (0) target = $region48
          $region47: #{tpu_custom_call.1} parent=43 // pred_region
            // Predicated region
            $region49: #{tpu_custom_call.1} parent=47 // pred_check
              _
            $region50: #{tpu_custom_call.1} parent=47 // pred_check_branch
              %243 = sbr.rel (0) target = $region52
            $region51: #{tpu_custom_call.1} parent=47 // pred_region
              // Predicated region
              $region64: #{tpu_custom_call.1} parent=51 // pred_check
                _
              $region65: #{tpu_custom_call.1} parent=51 // pred_check_branch
                %264 = sbr.rel (0) target = $region67
              $region66: #{tpu_custom_call.1} parent=51 // pred_region
                loop: start=0, step=1, limit=1
                $region68: #{tpu_custom_call.1} parent=66 // loop_pre_header
                  _
                $region69: #{tpu_custom_call.1} parent=66 // loop_header
                  %s266 = sphi 0, %s270
                  %p267 = scmp.ge.s32.totalorder %s266, 1
                  %s271 = sphi %s239, %s239
                  %s272 = sphi %s237, %s237
                $region70: #{tpu_custom_call.1} parent=66 // loop_header_branch
                  %269 = sbr.rel (%p267) target = $region74
                $region71: #{tpu_custom_call.1} parent=66 // loop_body
                  %v273 = vld [vmem:[%s271] sm:$0xff]
                  %274 = vst [vmem:[%s272] sm:$0xff] %v273
                  %v275 = vld [vmem:[%s271 + $0x10] sm:$0xff]
                  %276 = vst [vmem:[%s272 + $0x8] sm:$0xff] %v275
                  %v277 = vld [vmem:[%s271 + $0x20] sm:$0xff]
                  %278 = vst [vmem:[%s272 + $0x10] sm:$0xff] %v277
                  %v279 = vld [vmem:[%s271 + $0x30] sm:$0xff]
                  %280 = vst [vmem:[%s272 + $0x18] sm:$0xff] %v279
                $region72: #{tpu_custom_call.1} parent=66 // loop_footer
                  %s270 = sadd.s32 1, %s266
                $region73: #{tpu_custom_call.1} parent=66 // loop_footer_branch
                  %265 = sbr.rel target = $region69
                $region74: #{tpu_custom_call.1} parent=66 // loop_exit
                  _
              $region67: #{tpu_custom_call.1} parent=51 // pred_fallthru
                _
              // Predicated region
              $region75: #{tpu_custom_call.1} parent=51 // pred_check
                _
              $region76: #{tpu_custom_call.1} parent=51 // pred_check_branch
                %282 = sbr.rel target = $region78
              $region77: #{tpu_custom_call.1} parent=51 // pred_region
                _
              $region78: #{tpu_custom_call.1} parent=51 // pred_fallthru
                _
            $region52: #{tpu_custom_call.1} parent=47 // pred_fallthru
              _
            // Predicated region
            $region53: #{tpu_custom_call.1} parent=47 // pred_check
              _
            $region54: #{tpu_custom_call.1} parent=47 // pred_check_branch
              %245 = sbr.rel target = $region56
            $region55: #{tpu_custom_call.1} parent=47 // pred_region
              loop: start=0, step=1, limit=1
              $region57: #{tpu_custom_call.1} parent=55 // loop_pre_header
                _
              $region58: #{tpu_custom_call.1} parent=55 // loop_header
                %s248 = sphi 0, %s252
                %p249 = scmp.ge.s32.totalorder %s248, 1
                %s253 = sphi %s239, %s239
                %s254 = sphi %s237, %s237
              $region59: #{tpu_custom_call.1} parent=55 // loop_header_branch
                %251 = sbr.rel (%p249) target = $region63
              $region60: #{tpu_custom_call.1} parent=55 // loop_body
                %v255 = vld [vmem:[%s253] sm:$0xff]
                %256 = vst [vmem:[%s254] sm:$0xff] %v255
                %v257 = vld [vmem:[%s253 + $0x10] sm:$0xff]
                %258 = vst [vmem:[%s254 + $0x8] sm:$0xff] %v257
                %v259 = vld [vmem:[%s253 + $0x20] sm:$0xff]
                %260 = vst [vmem:[%s254 + $0x10] sm:$0xff] %v259
                %v261 = vld [vmem:[%s253 + $0x30] sm:$0xff]
                %262 = vst [vmem:[%s254 + $0x18] sm:$0xff] %v261
              $region61: #{tpu_custom_call.1} parent=55 // loop_footer
                %s252 = sadd.s32 1, %s248
              $region62: #{tpu_custom_call.1} parent=55 // loop_footer_branch
                %247 = sbr.rel target = $region58
              $region63: #{tpu_custom_call.1} parent=55 // loop_exit
                _
            $region56: #{tpu_custom_call.1} parent=47 // pred_fallthru
              _
          $region48: #{tpu_custom_call.1} parent=43 // pred_fallthru
            _
          %283 = vnop
        $region44: #{tpu_custom_call.1} parent=39 // pred_fallthru
          _
      $region40: #{tpu_custom_call.1} parent=5 // pred_fallthru
        _
      %p284 = scmp.le.s32.totalorder 1, %s16
      %p285 = scmp.lt.s32.totalorder %s16, 3
      %p286 = pnand %p284, %p285
      %p287 = pneg %p286
      // Predicated region
      $region79: #{tpu_custom_call.1} parent=5 // pred_check
        _
      $region80: #{tpu_custom_call.1} parent=5 // pred_check_branch
        %289 = sbr.rel (%p286) target = $region82
      $region81: #{tpu_custom_call.1} parent=5 // pred_region
        %s290 = ssub.s32 %s16, 1
        %s291 = sand.u32 %s29, 1
        %s292 = sand.u32 %s29, 1
        %s293 = smul.addr %s292, 32
        %s294 = scalar_lea.vmem [#allocation2], %s293
        // Predicated region
        $region83: #{tpu_custom_call.1} parent=81 // pred_check
          %p295 = pneg %p42
        $region84: #{tpu_custom_call.1} parent=81 // pred_check_branch
          %297 = sbr.rel (%p295) target = $region86
        $region85: #{tpu_custom_call.1} parent=81 // pred_region
          _
        $region86: #{tpu_custom_call.1} parent=81 // pred_fallthru
          _
        %s298 = sand.u32 %s29, 1
        %s299 = sand.u32 %s29, 1
        %s300 = smul.addr %s299, 32
        %s301 = scalar_lea.vmem [#allocation2], %s300
        %p302 = pneg %p42
        %p303 = pneg %p39
        %p304 = pneg %p63
        %p305 = pneg %p60
        %p306 = pneg %p84
        %p307 = pneg %p81
        %p308 = pneg %p105
        %p309 = pneg %p102
        %p310 = pneg %p126
        %p311 = pneg %p123
        %p312 = pneg %p147
        %p313 = pneg %p144
        %p314 = pneg %p168
        %p315 = pneg %p165
        %p316 = pneg %p194
        %p317 = pneg %p191
        %s318 = sand.u32 %s181, 1
        %s319 = scalar_lea.sflag [#allocation4], %s318
        %s320 = sand.u32 %s181, 1
        %s321 = smul.addr %s320, 2
        %s322 = scalar_lea.vmem [#allocation3], %s321
        %v323 = vld [vmem:[%s294] sm:$0xff]
        %v324 = vld [vmem:[%s294 + $0x8] sm:$0xff]
        %v325 = vld [vmem:[%s294 + $0x10] sm:$0xff]
        %v326 = vld [vmem:[%s294 + $0x18] sm:$0xff]
        %v327 = vld [vmem:[%s1] sm:$0xff]
        %v328 = vld [vmem:[%s1 + $0x8] sm:$0xff]
        %v329 = vld [vmem:[%s1 + $0x10] sm:$0xff]
        %v330 = vld [vmem:[%s1 + $0x18] sm:$0xff]
        %v331 = vld [vmem:[%s1 + $0x20] sm:$0xff]
        %v332 = vld [vmem:[%s1 + $0x28] sm:$0xff]
        %v333 = vld [vmem:[%s1 + $0x30] sm:$0xff]
        %v334 = vld [vmem:[%s1 + $0x38] sm:$0xff]
        %v335 = vld [vmem:[%s2] sm:$0xff]
        %v336 = vld [vmem:[%s2 + $0x8] sm:$0xff]
        %v337 = vld [vmem:[%s2 + $0x10] sm:$0xff]
        %v338 = vld [vmem:[%s2 + $0x18] sm:$0xff]
        %v339 = vld [vmem:[%s2 + $0x20] sm:$0xff]
        %v340 = vld [vmem:[%s2 + $0x28] sm:$0xff]
        %v341 = vld [vmem:[%s2 + $0x30] sm:$0xff]
        %v342 = vld [vmem:[%s2 + $0x38] sm:$0xff]
        %344 = vset.pattern.permute.xlu0 0
        %345 = vperm.xlu0 %344, %v335
        %v346 = vpop.permute.xlu0 %345
        %349 = vset.pattern.permute.xlu0 0
        %350 = vperm.xlu0 %349, %v336
        %v351 = vpop.permute.xlu0 %350
        %354 = vset.pattern.permute.xlu0 0
        %355 = vperm.xlu0 %354, %v337
        %v356 = vpop.permute.xlu0 %355
        %359 = vset.pattern.permute.xlu0 0
        %360 = vperm.xlu0 %359, %v338
        %v361 = vpop.permute.xlu0 %360
        %364 = vset.pattern.permute.xlu0 0
        %365 = vperm.xlu0 %364, %v339
        %v366 = vpop.permute.xlu0 %365
        %369 = vset.pattern.permute.xlu0 0
        %370 = vperm.xlu0 %369, %v340
        %v371 = vpop.permute.xlu0 %370
        %374 = vset.pattern.permute.xlu0 0
        %375 = vperm.xlu0 %374, %v341
        %v376 = vpop.permute.xlu0 %375
        %379 = vset.pattern.permute.xlu0 0
        %380 = vperm.xlu0 %379, %v342
        %v381 = vpop.permute.xlu0 %380
        %vm383 = vcmask 261120
        %v385 = vsel %vm383, %v327, 0
        %v388 = vsel %vm383, %v328, 0
        %v391 = vsel %vm383, %v329, 0
        %v394 = vsel %vm383, %v330, 0
        %v397 = vsel %vm383, %v331, 0
        %v400 = vsel %vm383, %v332, 0
        %v403 = vsel %vm383, %v333, 0
        %v406 = vsel %vm383, %v334, 0
        %408 = vmatprep.subr.mxu0 0.0
        %409 = vmatpush1.msra.mxu0 %v323
        %410 = vmatprep.subr.mxu0 0.0
        %411 = vmatpush1.msra.mxu0 %v324
        %412 = vmatprep.subr.mxu0 0.0
        %413 = vmatpush1.msra.mxu0 %v325
        %414 = vmatprep.subr.mxu0 0.0
        %415 = vmatpush1.msra.mxu0 %v326
        %416 = vmatprep.subr.mxu0 0.0
        %417 = vmatpush1.msra.mxu0 0.0
        %418 = vmatprep.subr.mxu0 0.0
        %419 = vmatpush1.msra.mxu0 0.0
        %420 = vmatprep.subr.mxu0 0.0
        %421 = vmatpush1.msra.mxu0 0.0
        %422 = vmatprep.subr.mxu0 0.0
        %423 = vmatpush1.msra.mxu0 0.0
        %424 = vmatprep.subr.mxu0 0.0
        %425 = vmatpush1.msra.mxu0 0.0
        %426 = vmatprep.subr.mxu0 0.0
        %427 = vmatpush1.msra.mxu0 0.0
        %428 = vmatprep.subr.mxu0 0.0
        %429 = vmatpush1.msra.mxu0 0.0
        %430 = vmatprep.subr.mxu0 0.0
        %431 = vmatpush1.msra.mxu0 0.0
        %432 = vmatprep.subr.mxu0 0.0
        %433 = vmatpush1.msra.mxu0 0.0
        %434 = vmatprep.subr.mxu0 0.0
        %435 = vmatpush1.msra.mxu0 0.0
        %436 = vmatprep.subr.mxu0 0.0
        %437 = vmatpush1.msra.mxu0 0.0
        %438 = vmatprep.subr.mxu0 0.0
        %439 = vmatpush1.msra.mxu0 0.0
        %440 = vmatprep.subr.mxu0 0.0
        %441 = vmatpush1.msra.mxu0 0.0
        %442 = vmatprep.subr.mxu0 0.0
        %443 = vmatpush1.msra.mxu0 0.0
        %444 = vmatprep.subr.mxu0 0.0
        %445 = vmatpush1.msra.mxu0 0.0
        %446 = vmatprep.subr.mxu0 0.0
        %447 = vmatpush1.msra.mxu0 0.0
        %448 = vmatprep.subr.mxu0 0.0
        %449 = vmatpush1.msra.mxu0 0.0
        %450 = vmatprep.subr.mxu0 0.0
        %451 = vmatpush1.msra.mxu0 0.0
        %452 = vmatprep.subr.mxu0 0.0
        %453 = vmatpush1.msra.mxu0 0.0
        %454 = vmatprep.subr.mxu0 0.0
        %455 = vmatpush1.msra.mxu0 0.0
        %456 = vmatprep.subr.mxu0 0.0
        %457 = vmatpush1.msra.mxu0 0.0
        %458 = vmatprep.subr.mxu0 0.0
        %459 = vmatpush1.msra.mxu0 0.0
        %460 = vmatprep.subr.mxu0 0.0
        %461 = vmatpush1.msra.mxu0 0.0
        %462 = vmatprep.subr.mxu0 0.0
        %463 = vmatpush1.msra.mxu0 0.0
        %464 = vmatprep.subr.mxu0 0.0
        %465 = vmatpush1.msra.mxu0 0.0
        %466 = vmatprep.subr.mxu0 0.0
        %467 = vmatpush1.msra.mxu0 0.0
        %468 = vmatprep.subr.mxu0 0.0
        %469 = vmatpush1.msra.mxu0 0.0
        %470 = vmatprep.subr.mxu0 0.0
        %471 = vmatpush1.msra.mxu0 0.0
        %472 = vmatprep.mubr.f32.mxu0 0.0
        %473 = vmatmul.mubr.f32.gmra.mrb[0].mxu0 %v385
        %v474 = vpop.f32.mrb[0].mxu0
        %v475 = vadd.f32 %v346, %v474
        %v476 = vpop.f32.mrb[0].mxu0
        %477 = vmatprep.mubr.f32.mxu0 0.0
        %478 = vmatmul.mubr.f32.gmra.mrb[0].mxu0 %v388
        %v479 = vpop.f32.mrb[0].mxu0
        %v480 = vadd.f32 %v351, %v479
        %v481 = vpop.f32.mrb[0].mxu0
        %482 = vmatprep.mubr.f32.mxu0 0.0
        %483 = vmatmul.mubr.f32.gmra.mrb[0].mxu0 %v391
        %v484 = vpop.f32.mrb[0].mxu0
        %v485 = vadd.f32 %v356, %v484
        %v486 = vpop.f32.mrb[0].mxu0
        %487 = vmatprep.mubr.f32.mxu0 0.0
        %488 = vmatmul.mubr.f32.gmra.mrb[0].mxu0 %v394
        %v489 = vpop.f32.mrb[0].mxu0
        %v490 = vadd.f32 %v361, %v489
        %v491 = vpop.f32.mrb[0].mxu0
        %492 = vmatprep.mubr.f32.mxu0 0.0
        %493 = vmatmul.mubr.f32.gmra.mrb[0].mxu0 %v397
        %v494 = vpop.f32.mrb[0].mxu0
        %v495 = vadd.f32 %v366, %v494
        %v496 = vpop.f32.mrb[0].mxu0
        %497 = vmatprep.mubr.f32.mxu0 0.0
        %498 = vmatmul.mubr.f32.gmra.mrb[0].mxu0 %v400
        %v499 = vpop.f32.mrb[0].mxu0
        %v500 = vadd.f32 %v371, %v499
        %v501 = vpop.f32.mrb[0].mxu0
        %502 = vmatprep.mubr.f32.mxu0 0.0
        %503 = vmatmul.mubr.f32.gmra.mrb[0].mxu0 %v403
        %v504 = vpop.f32.mrb[0].mxu0
        %v505 = vadd.f32 %v376, %v504
        %v506 = vpop.f32.mrb[0].mxu0
        %507 = vmatprep.mubr.f32.mxu0 0.0
        %508 = vmatmul.mubr.f32.gmra.mrb[0].mxu0 %v406
        %v509 = vpop.f32.mrb[0].mxu0
        %v510 = vadd.f32 %v381, %v509
        %v511 = vpop.f32.mrb[0].mxu0
        %512 = vdwg.mxu0
        %v513 = vxor.u32 %v475, 2147483648
        %v514 = vxor.u32 %v480, 2147483648
        %v515 = vxor.u32 %v485, 2147483648
        %v516 = vxor.u32 %v490, 2147483648
        %v517 = vxor.u32 %v495, 2147483648
        %v518 = vxor.u32 %v500, 2147483648
        %v519 = vxor.u32 %v505, 2147483648
        %v520 = vxor.u32 %v510, 2147483648
        %v521 = vmul.f32 %v513, 1.442695
        %v522 = vpow.pop %v521
        %v523 = vmul.f32 %v514, 1.442695
        %v524 = vpow.pop %v523
        %v525 = vmul.f32 %v515, 1.442695
        %v526 = vpow.pop %v525
        %v527 = vmul.f32 %v516, 1.442695
        %v528 = vpow.pop %v527
        %v529 = vmul.f32 %v517, 1.442695
        %v530 = vpow.pop %v529
        %v531 = vmul.f32 %v518, 1.442695
        %v532 = vpow.pop %v531
        %v533 = vmul.f32 %v519, 1.442695
        %v534 = vpow.pop %v533
        %v535 = vmul.f32 %v520, 1.442695
        %v536 = vpow.pop %v535
        %v537 = vadd.f32 %v522, 1.0
        %v538 = vadd.f32 %v524, 1.0
        %v539 = vadd.f32 %v526, 1.0
        %v540 = vadd.f32 %v528, 1.0
        %v541 = vadd.f32 %v530, 1.0
        %v542 = vadd.f32 %v532, 1.0
        %v543 = vadd.f32 %v534, 1.0
        %v544 = vadd.f32 %v536, 1.0
        %v545 = vrcp.pop %v537
        %v546 = vmul.f32 1.0, %v545
        %v547 = vrcp.pop %v538
        %v548 = vmul.f32 1.0, %v547
        %v549 = vrcp.pop %v539
        %v550 = vmul.f32 1.0, %v549
        %v551 = vrcp.pop %v540
        %v552 = vmul.f32 1.0, %v551
        %v553 = vrcp.pop %v541
        %v554 = vmul.f32 1.0, %v553
        %v555 = vrcp.pop %v542
        %v556 = vmul.f32 1.0, %v555
        %v557 = vrcp.pop %v543
        %v558 = vmul.f32 1.0, %v557
        %v559 = vrcp.pop %v544
        %v560 = vmul.f32 1.0, %v559
        %v561 = vmul.f32 %v475, %v546
        %v562 = vmul.f32 %v480, %v548
        %v563 = vmul.f32 %v485, %v550
        %v564 = vmul.f32 %v490, %v552
        %v565 = vmul.f32 %v495, %v554
        %v566 = vmul.f32 %v500, %v556
        %v567 = vmul.f32 %v505, %v558
        %v568 = vmul.f32 %v510, %v560
        %v569 = vld [vmem:[%s3] sm:$0xff]
        %v570 = vld [vmem:[%s3 + $0x8] sm:$0xff]
        %v571 = vld [vmem:[%s3 + $0x10] sm:$0xff]
        %v572 = vld [vmem:[%s3 + $0x18] sm:$0xff]
        %v573 = vld [vmem:[%s3 + $0x20] sm:$0xff]
        %v574 = vld [vmem:[%s3 + $0x28] sm:$0xff]
        %v575 = vld [vmem:[%s3 + $0x30] sm:$0xff]
        %v576 = vld [vmem:[%s3 + $0x38] sm:$0xff]
        %v577 = vld [vmem:[%s4] sm:$0xff]
        %v578 = vld [vmem:[%s4 + $0x8] sm:$0xff]
        %v579 = vld [vmem:[%s4 + $0x10] sm:$0xff]
        %v580 = vld [vmem:[%s4 + $0x18] sm:$0xff]
        %v581 = vld [vmem:[%s4 + $0x20] sm:$0xff]
        %v582 = vld [vmem:[%s4 + $0x28] sm:$0xff]
        %v583 = vld [vmem:[%s4 + $0x30] sm:$0xff]
        %v584 = vld [vmem:[%s4 + $0x38] sm:$0xff]
        %586 = vset.pattern.permute.xlu0 0
        %587 = vperm.xlu0 %586, %v577
        %v588 = vpop.permute.xlu0 %587
        %591 = vset.pattern.permute.xlu0 0
        %592 = vperm.xlu0 %591, %v578
        %v593 = vpop.permute.xlu0 %592
        %596 = vset.pattern.permute.xlu0 0
        %597 = vperm.xlu0 %596, %v579
        %v598 = vpop.permute.xlu0 %597
        %601 = vset.pattern.permute.xlu0 0
        %602 = vperm.xlu0 %601, %v580
        %v603 = vpop.permute.xlu0 %602
        %606 = vset.pattern.permute.xlu0 0
        %607 = vperm.xlu0 %606, %v581
        %v608 = vpop.permute.xlu0 %607
        %611 = vset.pattern.permute.xlu0 0
        %612 = vperm.xlu0 %611, %v582
        %v613 = vpop.permute.xlu0 %612
        %616 = vset.pattern.permute.xlu0 0
        %617 = vperm.xlu0 %616, %v583
        %v618 = vpop.permute.xlu0 %617
        %621 = vset.pattern.permute.xlu0 0
        %622 = vperm.xlu0 %621, %v584
        %v623 = vpop.permute.xlu0 %622
        %vm625 = vcmask 523264
        %v627 = vsel %vm625, %v569, 0
        %v630 = vsel %vm625, %v570, 0
        %v633 = vsel %vm625, %v571, 0
        %v636 = vsel %vm625, %v572, 0
        %v639 = vsel %vm625, %v573, 0
        %v642 = vsel %vm625, %v574, 0
        %v645 = vsel %vm625, %v575, 0
        %v648 = vsel %vm625, %v576, 0
        %650 = vmatprep.subr.mxu0 0.0
        %651 = vmatpush1.msra.mxu0 %v561
        %652 = vmatprep.subr.mxu0 0.0
        %653 = vmatpush1.msra.mxu0 %v562
        %654 = vmatprep.subr.mxu0 0.0
        %655 = vmatpush1.msra.mxu0 %v563
        %656 = vmatprep.subr.mxu0 0.0
        %657 = vmatpush1.msra.mxu0 %v564
        %658 = vmatprep.subr.mxu0 0.0
        %659 = vmatpush1.msra.mxu0 %v565
        %660 = vmatprep.subr.mxu0 0.0
        %661 = vmatpush1.msra.mxu0 %v566
        %662 = vmatprep.subr.mxu0 0.0
        %663 = vmatpush1.msra.mxu0 %v567
        %664 = vmatprep.subr.mxu0 0.0
        %665 = vmatpush1.msra.mxu0 %v568
        %666 = vmatprep.subr.mxu0 0.0
        %667 = vmatpush1.msra.mxu0 0.0
        %668 = vmatprep.subr.mxu0 0.0
        %669 = vmatpush1.msra.mxu0 0.0
        %670 = vmatprep.subr.mxu0 0.0
        %671 = vmatpush1.msra.mxu0 0.0
        %672 = vmatprep.subr.mxu0 0.0
        %673 = vmatpush1.msra.mxu0 0.0
        %674 = vmatprep.subr.mxu0 0.0
        %675 = vmatpush1.msra.mxu0 0.0
        %676 = vmatprep.subr.mxu0 0.0
        %677 = vmatpush1.msra.mxu0 0.0
        %678 = vmatprep.subr.mxu0 0.0
        %679 = vmatpush1.msra.mxu0 0.0
        %680 = vmatprep.subr.mxu0 0.0
        %681 = vmatpush1.msra.mxu0 0.0
        %682 = vmatprep.subr.mxu0 0.0
        %683 = vmatpush1.msra.mxu0 0.0
        %684 = vmatprep.subr.mxu0 0.0
        %685 = vmatpush1.msra.mxu0 0.0
        %686 = vmatprep.subr.mxu0 0.0
        %687 = vmatpush1.msra.mxu0 0.0
        %688 = vmatprep.subr.mxu0 0.0
        %689 = vmatpush1.msra.mxu0 0.0
        %690 = vmatprep.subr.mxu0 0.0
        %691 = vmatpush1.msra.mxu0 0.0
        %692 = vmatprep.subr.mxu0 0.0
        %693 = vmatpush1.msra.mxu0 0.0
        %694 = vmatprep.subr.mxu0 0.0
        %695 = vmatpush1.msra.mxu0 0.0
        %696 = vmatprep.subr.mxu0 0.0
        %697 = vmatpush1.msra.mxu0 0.0
        %698 = vmatprep.subr.mxu0 0.0
        %699 = vmatpush1.msra.mxu0 0.0
        %700 = vmatprep.subr.mxu0 0.0
        %701 = vmatpush1.msra.mxu0 0.0
        %702 = vmatprep.subr.mxu0 0.0
        %703 = vmatpush1.msra.mxu0 0.0
        %704 = vmatprep.subr.mxu0 0.0
        %705 = vmatpush1.msra.mxu0 0.0
        %706 = vmatprep.subr.mxu0 0.0
        %707 = vmatpush1.msra.mxu0 0.0
        %708 = vmatprep.subr.mxu0 0.0
        %709 = vmatpush1.msra.mxu0 0.0
        %710 = vmatprep.subr.mxu0 0.0
        %711 = vmatpush1.msra.mxu0 0.0
        %712 = vmatprep.subr.mxu0 0.0
        %713 = vmatpush1.msra.mxu0 0.0
        %714 = vmatprep.mubr.f32.mxu0 0.0
        %715 = vmatmul.mubr.f32.gmra.mrb[0].mxu0 %v627
        %v716 = vpop.f32.mrb[0].mxu0
        %v717 = vadd.f32 %v588, %v716
        %v718 = vpop.f32.mrb[0].mxu0
        %719 = vmatprep.mubr.f32.mxu0 0.0
        %720 = vmatmul.mubr.f32.gmra.mrb[0].mxu0 %v630
        %v721 = vpop.f32.mrb[0].mxu0
        %v722 = vadd.f32 %v593, %v721
        %v723 = vpop.f32.mrb[0].mxu0
        %724 = vmatprep.mubr.f32.mxu0 0.0
        %725 = vmatmul.mubr.f32.gmra.mrb[0].mxu0 %v633
        %v726 = vpop.f32.mrb[0].mxu0
        %v727 = vadd.f32 %v598, %v726
        %v728 = vpop.f32.mrb[0].mxu0
        %729 = vmatprep.mubr.f32.mxu0 0.0
        %730 = vmatmul.mubr.f32.gmra.mrb[0].mxu0 %v636
        %v731 = vpop.f32.mrb[0].mxu0
        %v732 = vadd.f32 %v603, %v731
        %v733 = vpop.f32.mrb[0].mxu0
        %734 = vmatprep.mubr.f32.mxu0 0.0
        %735 = vmatmul.mubr.f32.gmra.mrb[0].mxu0 %v639
        %v736 = vpop.f32.mrb[0].mxu0
        %v737 = vadd.f32 %v608, %v736
        %v738 = vpop.f32.mrb[0].mxu0
        %739 = vmatprep.mubr.f32.mxu0 0.0
        %740 = vmatmul.mubr.f32.gmra.mrb[0].mxu0 %v642
        %v741 = vpop.f32.mrb[0].mxu0
        %v742 = vadd.f32 %v613, %v741
        %v743 = vpop.f32.mrb[0].mxu0
        %744 = vmatprep.mubr.f32.mxu0 0.0
        %745 = vmatmul.mubr.f32.gmra.mrb[0].mxu0 %v645
        %v746 = vpop.f32.mrb[0].mxu0
        %v747 = vadd.f32 %v618, %v746
        %v748 = vpop.f32.mrb[0].mxu0
        %749 = vmatprep.mubr.f32.mxu0 0.0
        %750 = vmatmul.mubr.f32.gmra.mrb[0].mxu0 %v648
        %v751 = vpop.f32.mrb[0].mxu0
        %v752 = vadd.f32 %v623, %v751
        %v753 = vpop.f32.mrb[0].mxu0
        %754 = vdwg.mxu0
        %v755 = vxor.u32 %v717, 2147483648
        %v756 = vxor.u32 %v722, 2147483648
        %v757 = vxor.u32 %v727, 2147483648
        %v758 = vxor.u32 %v732, 2147483648
        %v759 = vxor.u32 %v737, 2147483648
        %v760 = vxor.u32 %v742, 2147483648
        %v761 = vxor.u32 %v747, 2147483648
        %v762 = vxor.u32 %v752, 2147483648
        %v763 = vmul.f32 %v755, 1.442695
        %v764 = vpow.pop %v763
        %v765 = vmul.f32 %v756, 1.442695
        %v766 = vpow.pop %v765
        %v767 = vmul.f32 %v757, 1.442695
        %v768 = vpow.pop %v767
        %v769 = vmul.f32 %v758, 1.442695
        %v770 = vpow.pop %v769
        %v771 = vmul.f32 %v759, 1.442695
        %v772 = vpow.pop %v771
        %v773 = vmul.f32 %v760, 1.442695
        %v774 = vpow.pop %v773
        %v775 = vmul.f32 %v761, 1.442695
        %v776 = vpow.pop %v775
        %v777 = vmul.f32 %v762, 1.442695
        %v778 = vpow.pop %v777
        %v779 = vadd.f32 %v764, 1.0
        %v780 = vadd.f32 %v766, 1.0
        %v781 = vadd.f32 %v768, 1.0
        %v782 = vadd.f32 %v770, 1.0
        %v783 = vadd.f32 %v772, 1.0
        %v784 = vadd.f32 %v774, 1.0
        %v785 = vadd.f32 %v776, 1.0
        %v786 = vadd.f32 %v778, 1.0
        %v787 = vrcp.pop %v779
        %v788 = vmul.f32 1.0, %v787
        %v789 = vrcp.pop %v780
        %v790 = vmul.f32 1.0, %v789
        %v791 = vrcp.pop %v781
        %v792 = vmul.f32 1.0, %v791
        %v793 = vrcp.pop %v782
        %v794 = vmul.f32 1.0, %v793
        %v795 = vrcp.pop %v783
        %v796 = vmul.f32 1.0, %v795
        %v797 = vrcp.pop %v784
        %v798 = vmul.f32 1.0, %v797
        %v799 = vrcp.pop %v785
        %v800 = vmul.f32 1.0, %v799
        %v801 = vrcp.pop %v786
        %v802 = vmul.f32 1.0, %v801
        %v803 = vmul.f32 %v717, %v788
        %v804 = vmul.f32 %v722, %v790
        %v805 = vmul.f32 %v727, %v792
        %v806 = vmul.f32 %v732, %v794
        %v807 = vmul.f32 %v737, %v796
        %v808 = vmul.f32 %v742, %v798
        %v809 = vmul.f32 %v747, %v800
        %v810 = vmul.f32 %v752, %v802
        %v811 = vld [vmem:[%s5] sm:$0x3]
        %v812 = vld [vmem:[%s6] sm:$0x3]
        %814 = vset.pattern.permute.xlu0 0
        %815 = vperm.xlu0 %814, %v812
        %v816 = vpop.permute.xlu0 %815
        %v819 = vsel %vm625, %v811, 0
        %821 = vmatprep.subr.mxu0 0.0
        %822 = vmatpush1.msra.mxu0 %v803
        %823 = vmatprep.subr.mxu0 0.0
        %824 = vmatpush1.msra.mxu0 %v804
        %825 = vmatprep.subr.mxu0 0.0
        %826 = vmatpush1.msra.mxu0 %v805
        %827 = vmatprep.subr.mxu0 0.0
        %828 = vmatpush1.msra.mxu0 %v806
        %829 = vmatprep.subr.mxu0 0.0
        %830 = vmatpush1.msra.mxu0 %v807
        %831 = vmatprep.subr.mxu0 0.0
        %832 = vmatpush1.msra.mxu0 %v808
        %833 = vmatprep.subr.mxu0 0.0
        %834 = vmatpush1.msra.mxu0 %v809
        %835 = vmatprep.subr.mxu0 0.0
        %836 = vmatpush1.msra.mxu0 %v810
        %837 = vmatprep.subr.mxu0 0.0
        %838 = vmatpush1.msra.mxu0 0.0
        %839 = vmatprep.subr.mxu0 0.0
        %840 = vmatpush1.msra.mxu0 0.0
        %841 = vmatprep.subr.mxu0 0.0
        %842 = vmatpush1.msra.mxu0 0.0
        %843 = vmatprep.subr.mxu0 0.0
        %844 = vmatpush1.msra.mxu0 0.0
        %845 = vmatprep.subr.mxu0 0.0
        %846 = vmatpush1.msra.mxu0 0.0
        %847 = vmatprep.subr.mxu0 0.0
        %848 = vmatpush1.msra.mxu0 0.0
        %849 = vmatprep.subr.mxu0 0.0
        %850 = vmatpush1.msra.mxu0 0.0
        %851 = vmatprep.subr.mxu0 0.0
        %852 = vmatpush1.msra.mxu0 0.0
        %853 = vmatprep.subr.mxu0 0.0
        %854 = vmatpush1.msra.mxu0 0.0
        %855 = vmatprep.subr.mxu0 0.0
        %856 = vmatpush1.msra.mxu0 0.0
        %857 = vmatprep.subr.mxu0 0.0
        %858 = vmatpush1.msra.mxu0 0.0
        %859 = vmatprep.subr.mxu0 0.0
        %860 = vmatpush1.msra.mxu0 0.0
        %861 = vmatprep.subr.mxu0 0.0
        %862 = vmatpush1.msra.mxu0 0.0
        %863 = vmatprep.subr.mxu0 0.0
        %864 = vmatpush1.msra.mxu0 0.0
        %865 = vmatprep.subr.mxu0 0.0
        %866 = vmatpush1.msra.mxu0 0.0
        %867 = vmatprep.subr.mxu0 0.0
        %868 = vmatpush1.msra.mxu0 0.0
        %869 = vmatprep.subr.mxu0 0.0
        %870 = vmatpush1.msra.mxu0 0.0
        %871 = vmatprep.subr.mxu0 0.0
        %872 = vmatpush1.msra.mxu0 0.0
        %873 = vmatprep.subr.mxu0 0.0
        %874 = vmatpush1.msra.mxu0 0.0
        %875 = vmatprep.subr.mxu0 0.0
        %876 = vmatpush1.msra.mxu0 0.0
        %877 = vmatprep.subr.mxu0 0.0
        %878 = vmatpush1.msra.mxu0 0.0
        %879 = vmatprep.subr.mxu0 0.0
        %880 = vmatpush1.msra.mxu0 0.0
        %881 = vmatprep.subr.mxu0 0.0
        %882 = vmatpush1.msra.mxu0 0.0
        %883 = vmatprep.subr.mxu0 0.0
        %884 = vmatpush1.msra.mxu0 0.0
        %885 = vmatprep.mubr.f32.mxu0 0.0
        %886 = vmatmul.mubr.f32.gmra.mrb[0].mxu0 %v819
        %v887 = vpop.f32.mrb[0].mxu0
        %v888 = vadd.f32 %v816, %v887
        %v889 = vpop.f32.mrb[0].mxu0
        %890 = vdwg.mxu0
        %891 = vst [vmem:[%s322] sm:$0x3] %v888
        %s892 = sand.u32 %s181, 1
        %s893 = scalar_lea.sflag [#allocation4], %s892
        %s894 = sand.u32 %s181, 1
        %s895 = smul.addr %s894, 2
        %s896 = scalar_lea.vmem [#allocation3], %s895
        // Predicated region
        $region87: #{tpu_custom_call.1} parent=81 // pred_check
          %p897 = pneg %p191
        $region88: #{tpu_custom_call.1} parent=81 // pred_check_branch
          %899 = sbr.rel (%p897) target = $region90
        $region89: #{tpu_custom_call.1} parent=81 // pred_region
          %s901 = ssub.s32 32, 32
          %902 = vsyncadd %s893, %s901
          %s903 = smul.addr %s21, 32
          %s904 = scalar_lea.hbm %s7, %s903
          %s906 = sshll.u32 %s896, 4
          %s907 = int_to_ptr.vmem [resolvable:$true] %s906
          %909 = dma.vmem_to_hbm [thread:$0]  %s907, 32, %s904, %s893
        $region90: #{tpu_custom_call.1} parent=81 // pred_fallthru
          _
      $region82: #{tpu_custom_call.1} parent=5 // pred_fallthru
        _
      %p910 = scmp.le.s32.totalorder 2, %s16
      // Predicated region
      $region91: #{tpu_custom_call.1} parent=5 // pred_check
        %p911 = pneg %p910
      $region92: #{tpu_custom_call.1} parent=5 // pred_check_branch
        %913 = sbr.rel (%p911) target = $region94
      $region93: #{tpu_custom_call.1} parent=5 // pred_region
        %s914 = ssub.s32 %s16, 2
        // Predicated region
        $region95: #{tpu_custom_call.1} parent=93 // pred_check
          %p915 = pneg %p197
        $region96: #{tpu_custom_call.1} parent=93 // pred_check_branch
          %917 = sbr.rel (%p915) target = $region98
        $region97: #{tpu_custom_call.1} parent=93 // pred_region
          %s918 = sand.u32 %s182, 1
          %s919 = scalar_lea.sflag [#allocation4], %s918
          %s920 = sand.u32 %s182, 1
          %s921 = smul.addr %s920, 2
          %s922 = scalar_lea.vmem [#allocation3], %s921
          %923 = dma.done %s919, 32
        $region98: #{tpu_custom_call.1} parent=93 // pred_fallthru
          _
      $region94: #{tpu_custom_call.1} parent=5 // pred_fallthru
        _
    $region6: #{tpu_custom_call.1} parent=1 // loop_footer
      %s20 = sadd.s32 1, %s16
    $region7: #{tpu_custom_call.1} parent=1 // loop_footer_branch
      %15 = sbr.rel target = $region3
    $region8: #{tpu_custom_call.1} parent=1 // loop_exit
      _
    %924 = vsyncpa [#allocation4], 1
    %s925 = scalar_lea.sflag [#allocation4], 1
    %926 = vsyncpa %s925, 1

</llo_original>
